<compile_context>
chip_gen: v7x
topology: tpu7x:2x2x1
jax: 0.10.0
libtpu: 0.0.40
codegen_flags: <defaults>
</compile_context>

<pallas_src>
import functools

import jax
import jax.numpy as jnp
from jax.experimental import pallas as pl
from jax.experimental.pallas import tpu as pltpu

input_size = 784
hidden_size = 100
num_classes = 10

H_PAD = 128    # hidden_size padded to full lane width
C_PAD = 128    # num_classes padded to full lane width (lane-dense output stores)
TB_MAX = 256   # max batch tile (bf16 x tile = 256*784*2 B ~= 0.4 MiB)


def mlp_kernel(x_ref, w1_ref, b1_ref, w2_ref, b2_ref, o_ref):
    # x:(TB,784) bf16 | w1:(784,128) bf16 | b1:(1,128) f32
    # w2:(128,128) bf16 | b2:(1,128) f32  | o:(TB,128) f32
    h = jnp.dot(x_ref[...], w1_ref[...], preferred_element_type=jnp.float32)
    h = jnp.maximum(h + b1_ref[...], 0.0)               # bias + ReLU in f32 (VPU)
    out = jnp.dot(h.astype(jnp.bfloat16), w2_ref[...],
                  preferred_element_type=jnp.float32) + b2_ref[...]
    o_ref[...] = out.astype(o_ref.dtype)


def _round_up(x, m):
    return ((x + m - 1) // m) * m


@jax.jit
def neural_net_forward(x, w1, b1, w2, b2):
    """out = relu(x @ w1 + b1) @ w2 + b2  with w1:(784,100), b1:(100,), w2:(100,10), b2:(10,)."""
    B = x.shape[0]

    # One-time layout prep: zero-pad to lane-dense shapes, cast matmul operands to bf16.
    w1p = jnp.zeros((input_size, H_PAD), jnp.bfloat16).at[:, :hidden_size].set(
        w1.astype(jnp.bfloat16))
    b1p = jnp.zeros((1, H_PAD), jnp.float32).at[:, :hidden_size].set(
        b1.reshape(1, hidden_size).astype(jnp.float32))
    w2p = jnp.zeros((H_PAD, C_PAD), jnp.bfloat16).at[:hidden_size, :num_classes].set(
        w2.astype(jnp.bfloat16))
    b2p = jnp.zeros((1, C_PAD), jnp.float32).at[:, :num_classes].set(
        b2.reshape(1, num_classes).astype(jnp.float32))

    # Batch tiling: tile size multiple of 8 sublanes, pad B up to a tile multiple.
    tb = min(TB_MAX, _round_up(B, 8))
    b_pad = _round_up(B, tb)
    xp = x.astype(jnp.bfloat16)
    if b_pad != B:
        xp = jnp.pad(xp, ((0, b_pad - B), (0, 0)))

    out_padded = pl.pallas_call(
        mlp_kernel,
        out_shape=jax.ShapeDtypeStruct((b_pad, C_PAD), jnp.float32),
        grid=(b_pad // tb,),
        in_specs=[
            pl.BlockSpec((tb, input_size), lambda i: (i, 0)),     # x: pipelined per batch tile
            pl.BlockSpec((input_size, H_PAD), lambda i: (0, 0)),  # w1: VMEM-resident
            pl.BlockSpec((1, H_PAD), lambda i: (0, 0)),           # b1: resident
            pl.BlockSpec((H_PAD, C_PAD), lambda i: (0, 0)),       # w2: resident
            pl.BlockSpec((1, C_PAD), lambda i: (0, 0)),           # b2: resident
        ],
        out_specs=pl.BlockSpec((tb, C_PAD), lambda i: (i, 0)),    # lane-dense unmasked stores
        compiler_params=pltpu.CompilerParams(
            dimension_semantics=("parallel",),                    # megacore-shard batch tiles
        ),
    )(xp, w1p, b1p, w2p, b2p)

    return out_padded[:B, :num_classes]


def init_params(key):
    # Deterministic init mimicking PyTorch nn.Linear: U(-1/sqrt(fan_in), 1/sqrt(fan_in)).
    k1, k2, k3, k4 = jax.random.split(key, 4)
    bound1 = 1.0 / (input_size ** 0.5)
    bound2 = 1.0 / (hidden_size ** 0.5)
    w1 = jax.random.uniform(k1, (input_size, hidden_size), jnp.float32, -bound1, bound1)
    b1 = jax.random.uniform(k2, (hidden_size,), jnp.float32, -bound1, bound1)
    w2 = jax.random.uniform(k3, (hidden_size, num_classes), jnp.float32, -bound2, bound2)
    b2 = jax.random.uniform(k4, (num_classes,), jnp.float32, -bound2, bound2)
    return w1, b1, w2, b2


if __name__ == "__main__":
    key = jax.random.PRNGKey(0)
    pkey, xkey = jax.random.split(key)
    w1, b1, w2, b2 = init_params(pkey)

    batch = 8
    x = jax.random.normal(xkey, (batch, input_size), jnp.float32)

    out = neural_net_forward(x, w1, b1, w2, b2)
    jax.block_until_ready(out)

    # Reference in plain f32 JAX (kernel uses bf16 MXU inputs with f32 accumulation,
    # so compare with a correspondingly loosened tolerance).
    ref = jnp.maximum(x @ w1 + b1, 0.0) @ w2 + b2
    assert out.shape == (batch, num_classes)
    assert jnp.allclose(out, ref, atol=5e-2, rtol=5e-2), float(jnp.max(jnp.abs(out - ref)))

    print("KERNEL_OK")
</pallas_src>

<mosaic_0001>
module attributes {stable_mosaic.version = 11 : i64} {
  func.func @mlp_kernel(%arg0: i32, %arg1: memref<8x784xbf16, #tpu.memory_space<vmem>>, %arg2: memref<784x128xbf16, #tpu.memory_space<vmem>>, %arg3: memref<1x128xf32, #tpu.memory_space<vmem>>, %arg4: memref<128x128xbf16, #tpu.memory_space<vmem>>, %arg5: memref<1x128xf32, #tpu.memory_space<vmem>>, %arg6: memref<8x128xf32, #tpu.memory_space<vmem>>) attributes {dimension_semantics = [#tpu.dimension_semantics<parallel>], iteration_bounds = array<i64: 1>, scalar_prefetch = 0 : i64, scratch_operands = 0 : i64, tpu.core_type = #tpu.core_type<tc>, window_params = [{transform_indices = @transform_0, window_bounds = array<i64: 8, 784>}, {pipeline_mode = #tpu.pipeline_mode<synchronous>, transform_indices = @transform_1, window_bounds = array<i64: 784, 128>}, {pipeline_mode = #tpu.pipeline_mode<synchronous>, transform_indices = @transform_2, window_bounds = array<i64: 1, 128>}, {pipeline_mode = #tpu.pipeline_mode<synchronous>, transform_indices = @transform_3, window_bounds = array<i64: 128, 128>}, {pipeline_mode = #tpu.pipeline_mode<synchronous>, transform_indices = @transform_4, window_bounds = array<i64: 1, 128>}, {transform_indices = @transform_5, window_bounds = array<i64: 8, 128>}]} {
    %c0 = arith.constant 0 : index
    %c0_0 = arith.constant 0 : index
    %0 = vector.load %arg1[%c0, %c0_0] : memref<8x784xbf16, #tpu.memory_space<vmem>>, vector<8x784xbf16>
    %c0_1 = arith.constant 0 : index
    %c0_2 = arith.constant 0 : index
    %1 = vector.load %arg2[%c0_1, %c0_2] : memref<784x128xbf16, #tpu.memory_space<vmem>>, vector<784x128xbf16>
    %cst = arith.constant dense<0.000000e+00> : vector<8x128xf32>
    %2 = tpu.matmul %0, %1, %cst {dimension_numbers = #tpu.dot_dimension_numbers<[1], [0], [0], [1], [0, 0, 1, 1], [], []>} : vector<8x784xbf16>, vector<784x128xbf16>, vector<8x128xf32> -> vector<8x128xf32>
    %c0_3 = arith.constant 0 : index
    %c0_4 = arith.constant 0 : index
    %3 = vector.load %arg3[%c0_3, %c0_4] : memref<1x128xf32, #tpu.memory_space<vmem>>, vector<1x128xf32>
    %4 = vector.broadcast %3 : vector<1x128xf32> to vector<8x128xf32>
    %5 = arith.addf %2, %4 : vector<8x128xf32>
    %cst_5 = arith.constant 0.000000e+00 : f32
    %6 = vector.broadcast %cst_5 : f32 to vector<8x128xf32>
    %7 = arith.maximumf %5, %6 : vector<8x128xf32>
    %8 = arith.truncf %7 : vector<8x128xf32> to vector<8x128xbf16>
    %c0_6 = arith.constant 0 : index
    %c0_7 = arith.constant 0 : index
    %9 = vector.load %arg4[%c0_6, %c0_7] : memref<128x128xbf16, #tpu.memory_space<vmem>>, vector<128x128xbf16>
    %cst_8 = arith.constant dense<0.000000e+00> : vector<8x128xf32>
    %10 = tpu.matmul %8, %9, %cst_8 {dimension_numbers = #tpu.dot_dimension_numbers<[1], [0], [0], [1], [0, 0, 1, 1], [], []>} : vector<8x128xbf16>, vector<128x128xbf16>, vector<8x128xf32> -> vector<8x128xf32>
    %c0_9 = arith.constant 0 : index
    %c0_10 = arith.constant 0 : index
    %11 = vector.load %arg5[%c0_9, %c0_10] : memref<1x128xf32, #tpu.memory_space<vmem>>, vector<1x128xf32>
    %12 = vector.broadcast %11 : vector<1x128xf32> to vector<8x128xf32>
    %13 = arith.addf %10, %12 : vector<8x128xf32>
    %c0_11 = arith.constant 0 : index
    %c0_12 = arith.constant 0 : index
    %14 = vector.load %arg6[%c0_11, %c0_12] : memref<8x128xf32, #tpu.memory_space<vmem>>, vector<8x128xf32>
    tpu.vector_store %arg6[%c0_11, %c0_12], %13 {strides = array<i32>} : memref<8x128xf32, #tpu.memory_space<vmem>>, vector<8x128xf32>,
    return
  }
  func.func @transform_0(%arg0: i32) -> (i32, i32) {
    %c0_i32 = arith.constant 0 : i32
    %c0_i32_0 = arith.constant 0 : i32
    return %arg0, %c0_i32 : i32, i32
  }
  func.func @transform_1(%arg0: i32) -> (i32, i32) {
    %c0_i32 = arith.constant 0 : i32
    %c0_i32_0 = arith.constant 0 : i32
    %c0_i32_1 = arith.constant 0 : i32
    return %c0_i32, %c0_i32_0 : i32, i32
  }
  func.func @transform_2(%arg0: i32) -> (i32, i32) {
    %c0_i32 = arith.constant 0 : i32
    %c0_i32_0 = arith.constant 0 : i32
    %c0_i32_1 = arith.constant 0 : i32
    return %c0_i32, %c0_i32_0 : i32, i32
  }
  func.func @transform_3(%arg0: i32) -> (i32, i32) {
    %c0_i32 = arith.constant 0 : i32
    %c0_i32_0 = arith.constant 0 : i32
    %c0_i32_1 = arith.constant 0 : i32
    return %c0_i32, %c0_i32_0 : i32, i32
  }
  func.func @transform_4(%arg0: i32) -> (i32, i32) {
    %c0_i32 = arith.constant 0 : i32
    %c0_i32_0 = arith.constant 0 : i32
    %c0_i32_1 = arith.constant 0 : i32
    return %c0_i32, %c0_i32_0 : i32, i32
  }
  func.func @transform_5(%arg0: i32) -> (i32, i32) {
    %c0_i32 = arith.constant 0 : i32
    %c0_i32_0 = arith.constant 0 : i32
    return %arg0, %c0_i32 : i32, i32
  }
}

</mosaic_0001>

<llo_original>
// kernel: neural_net_forward.1
$region0: #{neural_net_forward.1}
  #allocation0 [shape = 'u32[]', space=smem, size = 0x4, offset = 0x4, fixed_abs, tag = 'smem constant byte address 0x4 - core index']
  #allocation1 [shape = 'u32[144,128]{1,0:T(1,128)}', space=vmem, size = 0x12000, scoped, tag = 'internal scratch']
  %s0 = inlined_call_operand.vmem [shape: bf16[8,784], index: 0, kind: input, shape index: {}]
  %s1 = inlined_call_operand.vmem [shape: bf16[784,128], index: 1, kind: input, shape index: {}]
  %s2 = inlined_call_operand.vmem [shape: f32[1,128], index: 2, kind: input, shape index: {}]
  %s3 = inlined_call_operand.vmem [shape: bf16[128,128], index: 3, kind: input, shape index: {}]
  %s4 = inlined_call_operand.vmem [shape: f32[1,128], index: 4, kind: input, shape index: {}]
  %s5 = inlined_call_operand.hbm [shape: f32[8,128], index: 5, kind: output, shape index: {}]
  %s6 = sld [smem:[#allocation0]]
  $region30: #{neural_net_forward.1} parent=0
    _
  %s8 = ssub.s32 1, %s6
  %s9 = scalar_select 0, %s8, %s6
  $region1: #{neural_net_forward.1} parent=0
    #allocation2 [shape = 'u8[4096]{0}', space=vmem, size = 0x1000, scoped, tag = 'output window, operand 0, single buffered']
    #allocation3 [shape = 's32[1]{0}', space=sflag, size = 0x4, scoped, tag = 'scoped memory for neural_net_forward.1']
    %10 = vsyncpa [#allocation3], 0
    // Predicated region
    $region2: #{neural_net_forward.1} parent=1 // pred_check
      _
    $region3: #{neural_net_forward.1} parent=1 // pred_check_branch
      %12 = sbr.rel (0) target = $region5
    $region4: #{neural_net_forward.1} parent=1 // pred_region
      _
    $region5: #{neural_net_forward.1} parent=1 // pred_fallthru
      _
    // Predicated region
    $region6: #{neural_net_forward.1} parent=1 // pred_check
      _
    $region7: #{neural_net_forward.1} parent=1 // pred_check_branch
      %14 = sbr.rel (0) target = $region9
    $region8: #{neural_net_forward.1} parent=1 // pred_region
      _
    $region9: #{neural_net_forward.1} parent=1 // pred_fallthru
      _
    // Predicated region
    $region10: #{neural_net_forward.1} parent=1 // pred_check
      _
    $region11: #{neural_net_forward.1} parent=1 // pred_check_branch
      %16 = sbr.rel (0) target = $region13
    $region12: #{neural_net_forward.1} parent=1 // pred_region
      _
    $region13: #{neural_net_forward.1} parent=1 // pred_fallthru
      _
    // Predicated region
    $region14: #{neural_net_forward.1} parent=1 // pred_check
      _
    $region15: #{neural_net_forward.1} parent=1 // pred_check_branch
      %18 = sbr.rel (0) target = $region17
    $region16: #{neural_net_forward.1} parent=1 // pred_region
      _
    $region17: #{neural_net_forward.1} parent=1 // pred_fallthru
      _
    // Predicated region
    $region18: #{neural_net_forward.1} parent=1 // pred_check
      _
    $region19: #{neural_net_forward.1} parent=1 // pred_check_branch
      %20 = sbr.rel (0) target = $region21
    $region20: #{neural_net_forward.1} parent=1 // pred_region
      _
    $region21: #{neural_net_forward.1} parent=1 // pred_fallthru
      _
    %v22 = vld [vmem:[%s0] sm:$0xff]
    %v23 = vld [vmem:[%s0 + $0x8] sm:$0xff]
    %v24 = vld [vmem:[%s0 + $0x10] sm:$0xff]
    %v25 = vld [vmem:[%s0 + $0x18] sm:$0xf]
    %v26 = vld [vmem:[%s1] sm:$0xf]
    %v27 = vld [vmem:[%s1 + $0x4] sm:$0xf]
    %v28 = vld [vmem:[%s1 + $0x8] sm:$0xf]
    %v29 = vld [vmem:[%s1 + $0xc] sm:$0xf]
    %v30 = vld [vmem:[%s1 + $0x10] sm:$0xf]
    %v31 = vld [vmem:[%s1 + $0x14] sm:$0xf]
    %v32 = vld [vmem:[%s1 + $0x18] sm:$0xf]
    %v33 = vld [vmem:[%s1 + $0x1c] sm:$0xf]
    %v34 = vld [vmem:[%s1 + $0x20] sm:$0xf]
    %v35 = vld [vmem:[%s1 + $0x24] sm:$0xf]
    %v36 = vld [vmem:[%s1 + $0x28] sm:$0xf]
    %v37 = vld [vmem:[%s1 + $0x2c] sm:$0xf]
    %v38 = vld [vmem:[%s1 + $0x30] sm:$0xf]
    %v39 = vld [vmem:[%s1 + $0x34] sm:$0xf]
    %v40 = vld [vmem:[%s1 + $0x38] sm:$0xf]
    %v41 = vld [vmem:[%s1 + $0x3c] sm:$0xf]
    %v42 = vld [vmem:[%s1 + $0x40] sm:$0xf]
    %v43 = vld [vmem:[%s1 + $0x44] sm:$0xf]
    %v44 = vld [vmem:[%s1 + $0x48] sm:$0xf]
    %v45 = vld [vmem:[%s1 + $0x4c] sm:$0xf]
    %v46 = vld [vmem:[%s1 + $0x50] sm:$0xf]
    %v47 = vld [vmem:[%s1 + $0x54] sm:$0xf]
    %v48 = vld [vmem:[%s1 + $0x58] sm:$0xf]
    %v49 = vld [vmem:[%s1 + $0x5c] sm:$0xf]
    %v50 = vld [vmem:[%s1 + $0x60] sm:$0xf]
    %v51 = vld [vmem:[%s1 + $0x64] sm:$0xf]
    %v52 = vld [vmem:[%s1 + $0x68] sm:$0xf]
    %v53 = vld [vmem:[%s1 + $0x6c] sm:$0xf]
    %v54 = vld [vmem:[%s1 + $0x70] sm:$0xf]
    %v55 = vld [vmem:[%s1 + $0x74] sm:$0xf]
    %v56 = vld [vmem:[%s1 + $0x78] sm:$0xf]
    %v57 = vld [vmem:[%s1 + $0x7c] sm:$0xf]
    %v58 = vld [vmem:[%s1 + $0x80] sm:$0xf]
    %v59 = vld [vmem:[%s1 + $0x84] sm:$0xf]
    %v60 = vld [vmem:[%s1 + $0x88] sm:$0xf]
    %v61 = vld [vmem:[%s1 + $0x8c] sm:$0xf]
    %v62 = vld [vmem:[%s1 + $0x90] sm:$0xf]
    %v63 = vld [vmem:[%s1 + $0x94] sm:$0xf]
    %v64 = vld [vmem:[%s1 + $0x98] sm:$0xf]
    %v65 = vld [vmem:[%s1 + $0x9c] sm:$0xf]
    %v66 = vld [vmem:[%s1 + $0xa0] sm:$0xf]
    %v67 = vld [vmem:[%s1 + $0xa4] sm:$0xf]
    %v68 = vld [vmem:[%s1 + $0xa8] sm:$0xf]
    %v69 = vld [vmem:[%s1 + $0xac] sm:$0xf]
    %v70 = vld [vmem:[%s1 + $0xb0] sm:$0xf]
    %v71 = vld [vmem:[%s1 + $0xb4] sm:$0xf]
    %v72 = vld [vmem:[%s1 + $0xb8] sm:$0xf]
    %v73 = vld [vmem:[%s1 + $0xbc] sm:$0xf]
    %v74 = vld [vmem:[%s1 + $0xc0] sm:$0xf]
    %v75 = vld [vmem:[%s1 + $0xc4] sm:$0xf]
    %v76 = vld [vmem:[%s1 + $0xc8] sm:$0xf]
    %v77 = vld [vmem:[%s1 + $0xcc] sm:$0xf]
    %v78 = vld [vmem:[%s1 + $0xd0] sm:$0xf]
    %v79 = vld [vmem:[%s1 + $0xd4] sm:$0xf]
    %v80 = vld [vmem:[%s1 + $0xd8] sm:$0xf]
    %v81 = vld [vmem:[%s1 + $0xdc] sm:$0xf]
    %v82 = vld [vmem:[%s1 + $0xe0] sm:$0xf]
    %v83 = vld [vmem:[%s1 + $0xe4] sm:$0xf]
    %v84 = vld [vmem:[%s1 + $0xe8] sm:$0xf]
    %v85 = vld [vmem:[%s1 + $0xec] sm:$0xf]
    %v86 = vld [vmem:[%s1 + $0xf0] sm:$0xf]
    %v87 = vld [vmem:[%s1 + $0xf4] sm:$0xf]
    %v88 = vld [vmem:[%s1 + $0xf8] sm:$0xf]
    %v89 = vld [vmem:[%s1 + $0xfc] sm:$0xf]
    %v90 = vld [vmem:[%s1 + $0x100] sm:$0xf]
    %v91 = vld [vmem:[%s1 + $0x104] sm:$0xf]
    %v92 = vld [vmem:[%s1 + $0x108] sm:$0xf]
    %v93 = vld [vmem:[%s1 + $0x10c] sm:$0xf]
    %v94 = vld [vmem:[%s1 + $0x110] sm:$0xf]
    %v95 = vld [vmem:[%s1 + $0x114] sm:$0xf]
    %v96 = vld [vmem:[%s1 + $0x118] sm:$0xf]
    %v97 = vld [vmem:[%s1 + $0x11c] sm:$0xf]
    %v98 = vld [vmem:[%s1 + $0x120] sm:$0xf]
    %v99 = vld [vmem:[%s1 + $0x124] sm:$0xf]
    %v100 = vld [vmem:[%s1 + $0x128] sm:$0xf]
    %v101 = vld [vmem:[%s1 + $0x12c] sm:$0xf]
    %v102 = vld [vmem:[%s1 + $0x130] sm:$0xf]
    %v103 = vld [vmem:[%s1 + $0x134] sm:$0xf]
    %v104 = vld [vmem:[%s1 + $0x138] sm:$0xf]
    %v105 = vld [vmem:[%s1 + $0x13c] sm:$0xf]
    %v106 = vld [vmem:[%s1 + $0x140] sm:$0xf]
    %v107 = vld [vmem:[%s1 + $0x144] sm:$0xf]
    %v108 = vld [vmem:[%s1 + $0x148] sm:$0xf]
    %v109 = vld [vmem:[%s1 + $0x14c] sm:$0xf]
    %v110 = vld [vmem:[%s1 + $0x150] sm:$0xf]
    %v111 = vld [vmem:[%s1 + $0x154] sm:$0xf]
    %v112 = vld [vmem:[%s1 + $0x158] sm:$0xf]
    %v113 = vld [vmem:[%s1 + $0x15c] sm:$0xf]
    %v114 = vld [vmem:[%s1 + $0x160] sm:$0xf]
    %v115 = vld [vmem:[%s1 + $0x164] sm:$0xf]
    %v116 = vld [vmem:[%s1 + $0x168] sm:$0xf]
    %v117 = vld [vmem:[%s1 + $0x16c] sm:$0xf]
    %v118 = vld [vmem:[%s1 + $0x170] sm:$0xf]
    %v119 = vld [vmem:[%s1 + $0x174] sm:$0xf]
    %v120 = vld [vmem:[%s1 + $0x178] sm:$0xf]
    %v121 = vld [vmem:[%s1 + $0x17c] sm:$0xf]
    %v122 = vld [vmem:[%s1 + $0x180] sm:$0xf]
    %v123 = vld [vmem:[%s1 + $0x184] sm:$0xf]
    %v124 = vld [vmem:[%s2] sm:$0x1]
    %v126 = vlaneseq
    %v127 = vshrl.u32 %v126, 7
    %v128 = vsub.s32 0, %v127
    %v129 = vrot.slane %v124, %v128
    %v135 = vunpack.c.l.b16 %v22
    %v136 = vunpack.c.h.b16 %v22
    %v137 = vunpack.c.l.b16 %v23
    %v138 = vunpack.c.h.b16 %v23
    %v139 = vunpack.c.l.b16 %v24
    %v140 = vunpack.c.h.b16 %v24
    %v141 = vunpack.c.l.b16 %v25
    %v142 = vpack.c.b16 %v135, %v135
    %v143 = vpack.c.b16 %v136, %v136
    %v144 = vpack.c.b16 %v137, %v137
    %v145 = vpack.c.b16 %v138, %v138
    %v146 = vpack.c.b16 %v139, %v139
    %v147 = vpack.c.b16 %v140, %v140
    %v148 = vpack.c.b16 %v141, %v141
    %v253 = vunpack.c.l.b16 %v26
    %v254 = vunpack.c.l.b16 %v27
    %v255 = vunpack.c.l.b16 %v28
    %v256 = vunpack.c.l.b16 %v29
    %v257 = vunpack.c.l.b16 %v30
    %v258 = vunpack.c.l.b16 %v31
    %v259 = vunpack.c.l.b16 %v32
    %v260 = vunpack.c.l.b16 %v33
    %v261 = vunpack.c.l.b16 %v34
    %v262 = vunpack.c.l.b16 %v35
    %v263 = vunpack.c.l.b16 %v36
    %v264 = vunpack.c.l.b16 %v37
    %v265 = vunpack.c.l.b16 %v38
    %v266 = vunpack.c.l.b16 %v39
    %v267 = vunpack.c.l.b16 %v40
    %v268 = vunpack.c.l.b16 %v41
    %v269 = vunpack.c.l.b16 %v42
    %v270 = vunpack.c.l.b16 %v43
    %v271 = vunpack.c.l.b16 %v44
    %v272 = vunpack.c.l.b16 %v45
    %v273 = vunpack.c.l.b16 %v46
    %v274 = vunpack.c.l.b16 %v47
    %v275 = vunpack.c.l.b16 %v48
    %v276 = vunpack.c.l.b16 %v49
    %v277 = vunpack.c.l.b16 %v50
    %v278 = vunpack.c.l.b16 %v51
    %v279 = vunpack.c.l.b16 %v52
    %v280 = vunpack.c.l.b16 %v53
    %v281 = vunpack.c.l.b16 %v54
    %v282 = vunpack.c.l.b16 %v55
    %v283 = vunpack.c.l.b16 %v56
    %v284 = vunpack.c.l.b16 %v57
    %v285 = vunpack.c.l.b16 %v58
    %v286 = vunpack.c.l.b16 %v59
    %v287 = vunpack.c.l.b16 %v60
    %v288 = vunpack.c.l.b16 %v61
    %v289 = vunpack.c.l.b16 %v62
    %v290 = vunpack.c.l.b16 %v63
    %v291 = vunpack.c.l.b16 %v64
    %v292 = vunpack.c.l.b16 %v65
    %v293 = vunpack.c.l.b16 %v66
    %v294 = vunpack.c.l.b16 %v67
    %v295 = vunpack.c.l.b16 %v68
    %v296 = vunpack.c.l.b16 %v69
    %v297 = vunpack.c.l.b16 %v70
    %v298 = vunpack.c.l.b16 %v71
    %v299 = vunpack.c.l.b16 %v72
    %v300 = vunpack.c.l.b16 %v73
    %v301 = vunpack.c.l.b16 %v74
    %v302 = vunpack.c.l.b16 %v75
    %v303 = vunpack.c.l.b16 %v76
    %v304 = vunpack.c.l.b16 %v77
    %v305 = vunpack.c.l.b16 %v78
    %v306 = vunpack.c.l.b16 %v79
    %v307 = vunpack.c.l.b16 %v80
    %v308 = vunpack.c.l.b16 %v81
    %v309 = vunpack.c.l.b16 %v82
    %v310 = vunpack.c.l.b16 %v83
    %v311 = vunpack.c.l.b16 %v84
    %v312 = vunpack.c.l.b16 %v85
    %v313 = vunpack.c.l.b16 %v86
    %v314 = vunpack.c.l.b16 %v87
    %v315 = vunpack.c.l.b16 %v88
    %v316 = vunpack.c.l.b16 %v89
    %v317 = vunpack.c.l.b16 %v90
    %v318 = vunpack.c.l.b16 %v91
    %v319 = vunpack.c.l.b16 %v92
    %v320 = vunpack.c.l.b16 %v93
    %v321 = vunpack.c.l.b16 %v94
    %v322 = vunpack.c.l.b16 %v95
    %v323 = vunpack.c.l.b16 %v96
    %v324 = vunpack.c.l.b16 %v97
    %v325 = vunpack.c.l.b16 %v98
    %v326 = vunpack.c.l.b16 %v99
    %v327 = vunpack.c.l.b16 %v100
    %v328 = vunpack.c.l.b16 %v101
    %v329 = vunpack.c.l.b16 %v102
    %v330 = vunpack.c.l.b16 %v103
    %v331 = vunpack.c.l.b16 %v104
    %v332 = vunpack.c.l.b16 %v105
    %v333 = vunpack.c.l.b16 %v106
    %v334 = vunpack.c.l.b16 %v107
    %v335 = vunpack.c.l.b16 %v108
    %v336 = vunpack.c.l.b16 %v109
    %v337 = vunpack.c.l.b16 %v110
    %v338 = vunpack.c.l.b16 %v111
    %v339 = vunpack.c.l.b16 %v112
    %v340 = vunpack.c.l.b16 %v113
    %v341 = vunpack.c.l.b16 %v114
    %v342 = vunpack.c.l.b16 %v115
    %v343 = vunpack.c.l.b16 %v116
    %v344 = vunpack.c.l.b16 %v117
    %v345 = vunpack.c.l.b16 %v118
    %v346 = vunpack.c.l.b16 %v119
    %v347 = vunpack.c.l.b16 %v120
    %v348 = vunpack.c.l.b16 %v121
    %v349 = vunpack.c.l.b16 %v122
    %v350 = vunpack.c.l.b16 %v123
    %v351 = vpack.c.b16 %v254, %v253
    %v352 = vpack.c.b16 %v256, %v255
    %v353 = vpack.c.b16 %v258, %v257
    %v354 = vpack.c.b16 %v260, %v259
    %v355 = vpack.c.b16 %v262, %v261
    %v356 = vpack.c.b16 %v264, %v263
    %v357 = vpack.c.b16 %v266, %v265
    %v358 = vpack.c.b16 %v268, %v267
    %v359 = vpack.c.b16 %v270, %v269
    %v360 = vpack.c.b16 %v272, %v271
    %v361 = vpack.c.b16 %v274, %v273
    %v362 = vpack.c.b16 %v276, %v275
    %v363 = vpack.c.b16 %v278, %v277
    %v364 = vpack.c.b16 %v280, %v279
    %v365 = vpack.c.b16 %v282, %v281
    %v366 = vpack.c.b16 %v284, %v283
    %v367 = vpack.c.b16 %v286, %v285
    %v368 = vpack.c.b16 %v288, %v287
    %v369 = vpack.c.b16 %v290, %v289
    %v370 = vpack.c.b16 %v292, %v291
    %v371 = vpack.c.b16 %v294, %v293
    %v372 = vpack.c.b16 %v296, %v295
    %v373 = vpack.c.b16 %v298, %v297
    %v374 = vpack.c.b16 %v300, %v299
    %v375 = vpack.c.b16 %v302, %v301
    %v376 = vpack.c.b16 %v304, %v303
    %v377 = vpack.c.b16 %v306, %v305
    %v378 = vpack.c.b16 %v308, %v307
    %v379 = vpack.c.b16 %v310, %v309
    %v380 = vpack.c.b16 %v312, %v311
    %v381 = vpack.c.b16 %v314, %v313
    %v382 = vpack.c.b16 %v316, %v315
    %v383 = vpack.c.b16 %v318, %v317
    %v384 = vpack.c.b16 %v320, %v319
    %v385 = vpack.c.b16 %v322, %v321
    %v386 = vpack.c.b16 %v324, %v323
    %v387 = vpack.c.b16 %v326, %v325
    %v388 = vpack.c.b16 %v328, %v327
    %v389 = vpack.c.b16 %v330, %v329
    %v390 = vpack.c.b16 %v332, %v331
    %v391 = vpack.c.b16 %v334, %v333
    %v392 = vpack.c.b16 %v336, %v335
    %v393 = vpack.c.b16 %v338, %v337
    %v394 = vpack.c.b16 %v340, %v339
    %v395 = vpack.c.b16 %v342, %v341
    %v396 = vpack.c.b16 %v344, %v343
    %v397 = vpack.c.b16 %v346, %v345
    %v398 = vpack.c.b16 %v348, %v347
    %v399 = vpack.c.b16 %v350, %v349
    %vm449 = vcmask 130048
    %v451 = vsel %vm449, %v148, 0
    %453 = vmatprep.subr.bf16.mxu0 0
    %454 = vmatpush1.bf16.msra.mxu0 %v351
    %455 = vmatprep.subr.bf16.mxu0 0
    %456 = vmatpush1.bf16.msra.mxu0 %v352
    %457 = vmatprep.subr.bf16.mxu0 0
    %458 = vmatpush1.bf16.msra.mxu0 %v353
    %459 = vmatprep.subr.bf16.mxu0 0
    %460 = vmatpush1.bf16.msra.mxu0 %v354
    %461 = vmatprep.subr.bf16.mxu0 0
    %462 = vmatpush1.bf16.msra.mxu0 %v355
    %463 = vmatprep.subr.bf16.mxu0 0
    %464 = vmatpush1.bf16.msra.mxu0 %v356
    %465 = vmatprep.subr.bf16.mxu0 0
    %466 = vmatpush1.bf16.msra.mxu0 %v357
    %467 = vmatprep.subr.bf16.mxu0 0
    %468 = vmatpush1.bf16.msra.mxu0 %v358
    %469 = vmatprep.subr.bf16.mxu0 0
    %470 = vmatpush1.bf16.msra.mxu0 %v359
    %471 = vmatprep.subr.bf16.mxu0 0
    %472 = vmatpush1.bf16.msra.mxu0 %v360
    %473 = vmatprep.subr.bf16.mxu0 0
    %474 = vmatpush1.bf16.msra.mxu0 %v361
    %475 = vmatprep.subr.bf16.mxu0 0
    %476 = vmatpush1.bf16.msra.mxu0 %v362
    %477 = vmatprep.subr.bf16.mxu0 0
    %478 = vmatpush1.bf16.msra.mxu0 %v363
    %479 = vmatprep.subr.bf16.mxu0 0
    %480 = vmatpush1.bf16.msra.mxu0 %v364
    %481 = vmatprep.subr.bf16.mxu0 0
    %482 = vmatpush1.bf16.msra.mxu0 %v365
    %483 = vmatprep.subr.bf16.mxu0 0
    %484 = vmatpush1.bf16.msra.mxu0 %v366
    %485 = vmatprep.mubr.bf16.mxu0 %v143
    %486 = vmatmul.mubr.bf16.gmra.mrb[0].mxu0 %v142
    %v487 = vpop.f32.mrb[0].mxu0
    %v488 = vadd.f32 %v129, %v487
    %v489 = vpop.f32.mrb[0].mxu0
    %v490 = vpop.f32.mrb[0].mxu0
    %v491 = vpop.f32.mrb[0].mxu0
    %492 = vdwg.mxu0
    %493 = vmatprep.subr.bf16.mxu0 0
    %494 = vmatpush1.bf16.msra.mxu0 %v367
    %495 = vmatprep.subr.bf16.mxu0 0
    %496 = vmatpush1.bf16.msra.mxu0 %v368
    %497 = vmatprep.subr.bf16.mxu0 0
    %498 = vmatpush1.bf16.msra.mxu0 %v369
    %499 = vmatprep.subr.bf16.mxu0 0
    %500 = vmatpush1.bf16.msra.mxu0 %v370
    %501 = vmatprep.subr.bf16.mxu0 0
    %502 = vmatpush1.bf16.msra.mxu0 %v371
    %503 = vmatprep.subr.bf16.mxu0 0
    %504 = vmatpush1.bf16.msra.mxu0 %v372
    %505 = vmatprep.subr.bf16.mxu0 0
    %506 = vmatpush1.bf16.msra.mxu0 %v373
    %507 = vmatprep.subr.bf16.mxu0 0
    %508 = vmatpush1.bf16.msra.mxu0 %v374
    %509 = vmatprep.subr.bf16.mxu0 0
    %510 = vmatpush1.bf16.msra.mxu0 %v375
    %511 = vmatprep.subr.bf16.mxu0 0
    %512 = vmatpush1.bf16.msra.mxu0 %v376
    %513 = vmatprep.subr.bf16.mxu0 0
    %514 = vmatpush1.bf16.msra.mxu0 %v377
    %515 = vmatprep.subr.bf16.mxu0 0
    %516 = vmatpush1.bf16.msra.mxu0 %v378
    %517 = vmatprep.subr.bf16.mxu0 0
    %518 = vmatpush1.bf16.msra.mxu0 %v379
    %519 = vmatprep.subr.bf16.mxu0 0
    %520 = vmatpush1.bf16.msra.mxu0 %v380
    %521 = vmatprep.subr.bf16.mxu0 0
    %522 = vmatpush1.bf16.msra.mxu0 %v381
    %523 = vmatprep.subr.bf16.mxu0 0
    %524 = vmatpush1.bf16.msra.mxu0 %v382
    %525 = vmatprep.mubr.bf16.mxu0 %v145
    %526 = vmatmul.mubr.bf16.gmra.mrb[0].mxu0 %v144
    %v527 = vpop.f32.mrb[0].mxu0
    %v528 = vadd.f32 %v488, %v527
    %v529 = vpop.f32.mrb[0].mxu0
    %v530 = vpop.f32.mrb[0].mxu0
    %v531 = vpop.f32.mrb[0].mxu0
    %532 = vdwg.mxu0
    %533 = vmatprep.subr.bf16.mxu0 0
    %534 = vmatpush1.bf16.msra.mxu0 %v383
    %535 = vmatprep.subr.bf16.mxu0 0
    %536 = vmatpush1.bf16.msra.mxu0 %v384
    %537 = vmatprep.subr.bf16.mxu0 0
    %538 = vmatpush1.bf16.msra.mxu0 %v385
    %539 = vmatprep.subr.bf16.mxu0 0
    %540 = vmatpush1.bf16.msra.mxu0 %v386
    %541 = vmatprep.subr.bf16.mxu0 0
    %542 = vmatpush1.bf16.msra.mxu0 %v387
    %543 = vmatprep.subr.bf16.mxu0 0
    %544 = vmatpush1.bf16.msra.mxu0 %v388
    %545 = vmatprep.subr.bf16.mxu0 0
    %546 = vmatpush1.bf16.msra.mxu0 %v389
    %547 = vmatprep.subr.bf16.mxu0 0
    %548 = vmatpush1.bf16.msra.mxu0 %v390
    %549 = vmatprep.subr.bf16.mxu0 0
    %550 = vmatpush1.bf16.msra.mxu0 %v391
    %551 = vmatprep.subr.bf16.mxu0 0
    %552 = vmatpush1.bf16.msra.mxu0 %v392
    %553 = vmatprep.subr.bf16.mxu0 0
    %554 = vmatpush1.bf16.msra.mxu0 %v393
    %555 = vmatprep.subr.bf16.mxu0 0
    %556 = vmatpush1.bf16.msra.mxu0 %v394
    %557 = vmatprep.subr.bf16.mxu0 0
    %558 = vmatpush1.bf16.msra.mxu0 %v395
    %559 = vmatprep.subr.bf16.mxu0 0
    %560 = vmatpush1.bf16.msra.mxu0 %v396
    %561 = vmatprep.subr.bf16.mxu0 0
    %562 = vmatpush1.bf16.msra.mxu0 %v397
    %563 = vmatprep.subr.bf16.mxu0 0
    %564 = vmatpush1.bf16.msra.mxu0 %v398
    %565 = vmatprep.mubr.bf16.mxu0 %v147
    %566 = vmatmul.mubr.bf16.gmra.mrb[0].mxu0 %v146
    %v567 = vpop.f32.mrb[0].mxu0
    %v568 = vadd.f32 %v528, %v567
    %v569 = vpop.f32.mrb[0].mxu0
    %v570 = vpop.f32.mrb[0].mxu0
    %v571 = vpop.f32.mrb[0].mxu0
    %572 = vdwg.mxu0
    %573 = vmatprep.subr.bf16.mxu0 0
    %574 = vmatpush1.bf16.msra.mxu0 %v399
    %575 = vmatprep.subr.bf16.mxu0 0
    %576 = vmatpush1.bf16.msra.mxu0 0
    %577 = vmatprep.subr.bf16.mxu0 0
    %578 = vmatpush1.bf16.msra.mxu0 0
    %579 = vmatprep.subr.bf16.mxu0 0
    %580 = vmatpush1.bf16.msra.mxu0 0
    %581 = vmatprep.subr.bf16.mxu0 0
    %582 = vmatpush1.bf16.msra.mxu0 0
    %583 = vmatprep.subr.bf16.mxu0 0
    %584 = vmatpush1.bf16.msra.mxu0 0
    %585 = vmatprep.subr.bf16.mxu0 0
    %586 = vmatpush1.bf16.msra.mxu0 0
    %587 = vmatprep.subr.bf16.mxu0 0
    %588 = vmatpush1.bf16.msra.mxu0 0
    %589 = vmatprep.subr.bf16.mxu0 0
    %590 = vmatpush1.bf16.msra.mxu0 0
    %591 = vmatprep.subr.bf16.mxu0 0
    %592 = vmatpush1.bf16.msra.mxu0 0
    %593 = vmatprep.subr.bf16.mxu0 0
    %594 = vmatpush1.bf16.msra.mxu0 0
    %595 = vmatprep.subr.bf16.mxu0 0
    %596 = vmatpush1.bf16.msra.mxu0 0
    %597 = vmatprep.subr.bf16.mxu0 0
    %598 = vmatpush1.bf16.msra.mxu0 0
    %599 = vmatprep.subr.bf16.mxu0 0
    %600 = vmatpush1.bf16.msra.mxu0 0
    %601 = vmatprep.subr.bf16.mxu0 0
    %602 = vmatpush1.bf16.msra.mxu0 0
    %603 = vmatprep.subr.bf16.mxu0 0
    %604 = vmatpush1.bf16.msra.mxu0 0
    %605 = vmatprep.mubr.bf16.mxu0 0
    %606 = vmatmul.mubr.bf16.gmra.mrb[0].mxu0 %v451
    %v607 = vpop.f32.mrb[0].mxu0
    %v608 = vadd.f32 %v568, %v607
    %v609 = vpop.f32.mrb[0].mxu0
    %v610 = vpop.f32.mrb[0].mxu0
    %v611 = vpop.f32.mrb[0].mxu0
    %612 = vdwg.mxu0
    %v613 = vmax.f32 %v608, 0.0
    %v614 = vpack.c.bf16 %v613, %v613
    %v615 = vld [vmem:[%s3] sm:$0xf]
    %v616 = vld [vmem:[%s3 + $0x4] sm:$0xf]
    %v617 = vld [vmem:[%s3 + $0x8] sm:$0xf]
    %v618 = vld [vmem:[%s3 + $0xc] sm:$0xf]
    %v619 = vld [vmem:[%s3 + $0x10] sm:$0xf]
    %v620 = vld [vmem:[%s3 + $0x14] sm:$0xf]
    %v621 = vld [vmem:[%s3 + $0x18] sm:$0xf]
    %v622 = vld [vmem:[%s3 + $0x1c] sm:$0xf]
    %v623 = vld [vmem:[%s3 + $0x20] sm:$0xf]
    %v624 = vld [vmem:[%s3 + $0x24] sm:$0xf]
    %v625 = vld [vmem:[%s3 + $0x28] sm:$0xf]
    %v626 = vld [vmem:[%s3 + $0x2c] sm:$0xf]
    %v627 = vld [vmem:[%s3 + $0x30] sm:$0xf]
    %v628 = vld [vmem:[%s3 + $0x34] sm:$0xf]
    %v629 = vld [vmem:[%s3 + $0x38] sm:$0xf]
    %v630 = vld [vmem:[%s3 + $0x3c] sm:$0xf]
    %v631 = vld [vmem:[%s4] sm:$0x1]
    %v633 = vlaneseq
    %v634 = vshrl.u32 %v633, 7
    %v635 = vsub.s32 0, %v634
    %v636 = vrot.slane %v631, %v635
    %v654 = vunpack.c.l.b16 %v615
    %v655 = vunpack.c.l.b16 %v616
    %v656 = vunpack.c.l.b16 %v617
    %v657 = vunpack.c.l.b16 %v618
    %v658 = vunpack.c.l.b16 %v619
    %v659 = vunpack.c.l.b16 %v620
    %v660 = vunpack.c.l.b16 %v621
    %v661 = vunpack.c.l.b16 %v622
    %v662 = vunpack.c.l.b16 %v623
    %v663 = vunpack.c.l.b16 %v624
    %v664 = vunpack.c.l.b16 %v625
    %v665 = vunpack.c.l.b16 %v626
    %v666 = vunpack.c.l.b16 %v627
    %v667 = vunpack.c.l.b16 %v628
    %v668 = vunpack.c.l.b16 %v629
    %v669 = vunpack.c.l.b16 %v630
    %v670 = vpack.c.b16 %v655, %v654
    %v671 = vpack.c.b16 %v657, %v656
    %v672 = vpack.c.b16 %v659, %v658
    %v673 = vpack.c.b16 %v661, %v660
    %v674 = vpack.c.b16 %v663, %v662
    %v675 = vpack.c.b16 %v665, %v664
    %v676 = vpack.c.b16 %v667, %v666
    %v677 = vpack.c.b16 %v669, %v668
    %686 = vmatprep.subr.bf16.mxu0 0
    %687 = vmatpush1.bf16.msra.mxu0 %v670
    %688 = vmatprep.subr.bf16.mxu0 0
    %689 = vmatpush1.bf16.msra.mxu0 %v671
    %690 = vmatprep.subr.bf16.mxu0 0
    %691 = vmatpush1.bf16.msra.mxu0 %v672
    %692 = vmatprep.subr.bf16.mxu0 0
    %693 = vmatpush1.bf16.msra.mxu0 %v673
    %694 = vmatprep.subr.bf16.mxu0 0
    %695 = vmatpush1.bf16.msra.mxu0 %v674
    %696 = vmatprep.subr.bf16.mxu0 0
    %697 = vmatpush1.bf16.msra.mxu0 %v675
    %698 = vmatprep.subr.bf16.mxu0 0
    %699 = vmatpush1.bf16.msra.mxu0 %v676
    %700 = vmatprep.subr.bf16.mxu0 0
    %701 = vmatpush1.bf16.msra.mxu0 %v677
    %702 = vmatprep.subr.bf16.mxu0 0
    %703 = vmatpush1.bf16.msra.mxu0 0
    %704 = vmatprep.subr.bf16.mxu0 0
    %705 = vmatpush1.bf16.msra.mxu0 0
    %706 = vmatprep.subr.bf16.mxu0 0
    %707 = vmatpush1.bf16.msra.mxu0 0
    %708 = vmatprep.subr.bf16.mxu0 0
    %709 = vmatpush1.bf16.msra.mxu0 0
    %710 = vmatprep.subr.bf16.mxu0 0
    %711 = vmatpush1.bf16.msra.mxu0 0
    %712 = vmatprep.subr.bf16.mxu0 0
    %713 = vmatpush1.bf16.msra.mxu0 0
    %714 = vmatprep.subr.bf16.mxu0 0
    %715 = vmatpush1.bf16.msra.mxu0 0
    %716 = vmatprep.subr.bf16.mxu0 0
    %717 = vmatpush1.bf16.msra.mxu0 0
    %718 = vmatprep.mubr.bf16.mxu0 0
    %719 = vmatmul.mubr.bf16.gmra.mrb[0].mxu0 %v614
    %v720 = vpop.f32.mrb[0].mxu0
    %v721 = vadd.f32 %v636, %v720
    %v722 = vpop.f32.mrb[0].mxu0
    %v723 = vpop.f32.mrb[0].mxu0
    %v724 = vpop.f32.mrb[0].mxu0
    %725 = vdwg.mxu0
    %726 = vst [vmem:[#allocation2] sm:$0xff] %v721
    // Predicated region
    $region22: #{neural_net_forward.1} parent=1 // pred_check
      _
    $region23: #{neural_net_forward.1} parent=1 // pred_check_branch
      %728 = sbr.rel (0) target = $region25
    $region24: #{neural_net_forward.1} parent=1 // pred_region
      %s730 = ssub.s32 128, 128
      %731 = vsyncadd [#allocation3], %s730
      %s733 = sshll.u32 [#allocation2], 4
      %s734 = int_to_ptr.vmem [resolvable:$true] %s733
      %736 = dma.vmem_to_hbm [thread:$0]  %s734, 128, %s5, [#allocation3]
    $region25: #{neural_net_forward.1} parent=1 // pred_fallthru
      _
    // Predicated region
    $region26: #{neural_net_forward.1} parent=1 // pred_check
      _
    $region27: #{neural_net_forward.1} parent=1 // pred_check_branch
      %738 = sbr.rel (0) target = $region29
    $region28: #{neural_net_forward.1} parent=1 // pred_region
      %739 = dma.done [#allocation3], 128
    $region29: #{neural_net_forward.1} parent=1 // pred_fallthru
      _
    %740 = vsyncpa [#allocation3], 1

</llo_original>
